<compile_context>
chip_gen: v7x
topology: tpu7x:2x2x1
jax: 0.10.0
libtpu: 0.0.40
codegen_flags: <defaults>
</compile_context>

<pallas_src>
import functools

import jax
import jax.numpy as jnp
from jax.experimental import pallas as pl
from jax.experimental.pallas import tpu as pltpu


def _residual_block_kernel(x_ref, wa_ref, wb_ref, m_ref, out_ref, *,
                           W, chunk_w, n_chunks, last_relu, mxu_dtype):
    """One grid step = Bn images (n_chunks chunks of chunk_images images each).

    x_ref  : (1, n_chunks, Cp, chunk_w)  channels on sublanes, pixels (image-major) on lanes
    wa_ref : (Cp, Kp)   conv_a weights, 9 taps stacked on the contraction axis,
                        BN-a scale folded in, BN-a shift as bias column (col 9*Cp)
    wb_ref : (Cp, Kp)   conv_b likewise
    m_ref  : (Kp, chunk_w) stacked tap-validity mask (conv zero padding, tiled per
                        image) + bias row (row 9*Cp = 1, rest of bias block = 0)
    out_ref: (1, n_chunks, Cp, chunk_w)
    """
    # Tap offsets in the flattened (row-major, W fastest) per-image pixel index.
    offsets = [dh * W + dw for dh in (-1, 0, 1) for dw in (-1, 0, 1)]
    ones_blk = jnp.ones((8, chunk_w), jnp.float32)   # bias block; mask keeps only row 0

    def stacked_rhs(inp):
        # (Cp, chunk_w) -> (Kp, chunk_w): 9 rolled taps stacked along sublanes plus the
        # bias block, then one vmul with the mask zeroes conv padding and any
        # cross-image / wrap-around leakage from the lane rotation.
        taps = []
        for s in offsets:
            if s == 0:
                taps.append(inp)
            else:
                # xs[:, p] = inp[:, (p + s) mod chunk_w]; wrap is masked.
                taps.append(pltpu.roll(inp, shift=(-s) % chunk_w, axis=1))
        taps.append(ones_blk)
        rhs = jnp.concatenate(taps, axis=0) * m_ref[...]
        return rhs.astype(mxu_dtype)

    def body(c, carry):
        x = x_ref[0, c]                                            # (Cp, chunk_w)
        # conv_a + BN-a (scale folded, shift via bias column), then ReLU.
        y = jnp.dot(wa_ref[...], stacked_rhs(x),
                    preferred_element_type=jnp.float32)
        y = jnp.maximum(y, 0.0)
        # conv_b + BN-b.
        y2 = jnp.dot(wb_ref[...], stacked_rhs(y),
                     preferred_element_type=jnp.float32)
        out = x + y2                                               # residual add
        if last_relu:
            out = jnp.maximum(out, 0.0)
        out_ref[0, c] = out.astype(out_ref.dtype)
        return carry

    jax.lax.fori_loop(0, n_chunks, body, 0, unroll=True)


def residual_block_forward(x_nchw, params, *, eps=1e-5, last_relu=False,
                           mxu_dtype=jnp.float32):
    """ResidualBlock forward (increase_dim=False). x_nchw: (N, C, H, W) f32.

    mxu_dtype=jnp.bfloat16 is the fast path on v6e/v7x (f32 matmul is multi-pass
    there); keep f32 when ~1e-4 absolute accuracy is required.
    """
    wa, ga, bta, ma, va, wb, gb, btb, mb, vb = params           # conv weights are HWIO
    N, C, H, W = x_nchw.shape
    HW = H * W
    Cp = ((C + 7) // 8) * 8                                     # channels padded to sublane mult
    Kp = 9 * Cp + 8                                             # 9 stacked taps + bias block

    # ---- tiling: fuse several images onto the lane axis per grid step ---------------
    chunk_images = max(1, 512 // HW)                            # ~512-lane inner MXU width
    chunk_w = chunk_images * HW
    assert chunk_w % 128 == 0, "flattened spatial chunk must be lane-aligned"
    n_chunks = max(1, min(-(-N // chunk_images), max(1, 8 // chunk_images)))
    Bn = chunk_images * n_chunks                                # images per grid step
    Np = -(-N // Bn) * Bn                                       # batch padded to Bn
    G = Np // Bn                                                # grid size

    # ---- fold BN (inference) into conv weights (scale) + per-channel shift ----------
    inv_a = ga * jax.lax.rsqrt(va + eps)
    inv_b = gb * jax.lax.rsqrt(vb + eps)
    shift_a = bta - ma * inv_a
    shift_b = btb - mb * inv_b

    def prep_w(w_hwio, scale, shift):
        # HWIO (3,3,Ci,Co) -> (Cp, Kp): taps stacked along the contraction axis in
        # (dh, dw) order, BN scale folded on Co, BN shift appended as a bias column.
        co, ci = w_hwio.shape[3], w_hwio.shape[2]
        w9 = jnp.transpose(w_hwio, (0, 1, 3, 2)).reshape(9, co, ci)
        w9 = w9 * scale[None, :, None]
        w9 = jnp.pad(w9, ((0, 0), (0, Cp - co), (0, Cp - ci)))          # (9, Cp, Cp)
        wstk = jnp.transpose(w9, (1, 0, 2)).reshape(Cp, 9 * Cp)         # (Cp, 9*Cp)
        bias_col = jnp.pad(shift, (0, Cp - co)).reshape(Cp, 1)
        pad_cols = jnp.zeros((Cp, Kp - 9 * Cp - 1), jnp.float32)
        return jnp.concatenate([wstk, bias_col, pad_cols], axis=1).astype(mxu_dtype)

    wa_k = prep_w(wa, inv_a, shift_a)                                   # (Cp, Kp)
    wb_k = prep_w(wb, inv_b, shift_b)

    # ---- stacked tap-validity mask (the conv's zero padding), tiled per image -------
    p = jnp.arange(HW)
    hh, ww = p // W, p % W
    rows = []
    for dh in (-1, 0, 1):
        for dw in (-1, 0, 1):
            ok = (hh + dh >= 0) & (hh + dh < H) & (ww + dw >= 0) & (ww + dw < W)
            rows.append(jnp.broadcast_to(ok.astype(jnp.float32)[None, :], (Cp, HW)))
    bias_rows = jnp.zeros((8, HW), jnp.float32).at[0].set(1.0)          # keep only the ones row
    rows.append(bias_rows)
    mask = jnp.tile(jnp.concatenate(rows, axis=0), (1, chunk_images))   # (Kp, chunk_w)

    # ---- lane-dense, batch-fused input layout: (G, n_chunks, Cp, chunk_w) -----------
    x_flat = jnp.pad(x_nchw.reshape(N, C, HW).astype(jnp.float32),
                     ((0, Np - N), (0, Cp - C), (0, 0)))                # (Np, Cp, HW)
    x_fused = (x_flat.reshape(G, n_chunks, chunk_images, Cp, HW)
               .transpose(0, 1, 3, 2, 4)
               .reshape(G, n_chunks, Cp, chunk_w))

    kernel = functools.partial(_residual_block_kernel, W=W, chunk_w=chunk_w,
                               n_chunks=n_chunks, last_relu=last_relu,
                               mxu_dtype=mxu_dtype)

    # Advisory cost estimate so XLA schedules neighbors sensibly around this call.
    cost = pl.CostEstimate(
        flops=int(Np * 2 * 2 * Cp * Kp * HW),
        transcendentals=0,
        bytes_accessed=int(2 * x_fused.size * 4 + 2 * Cp * Kp * 4 + mask.size * 4))

    # Explicit VMEM budget (double-buffered in/out blocks + weights + mask), generous
    # margin but well under v7x's 64 MiB physical VMEM.
    block_bytes = 4 * (Bn * Cp * HW) * 4 + 2 * Cp * Kp * 4 + Kp * chunk_w * 4
    vmem_limit = int(min(max(4 * block_bytes, 8 * 1024 * 1024), 48 * 1024 * 1024))

    out_fused = pl.pallas_call(
        kernel,
        out_shape=jax.ShapeDtypeStruct((G, n_chunks, Cp, chunk_w), jnp.float32),
        grid_spec=pltpu.PrefetchScalarGridSpec(
            num_scalar_prefetch=0,
            grid=(G,),
            in_specs=[
                pl.BlockSpec((1, n_chunks, Cp, chunk_w), lambda g: (g, 0, 0, 0)),  # x
                pl.BlockSpec((Cp, Kp), lambda g: (0, 0)),                          # conv_a (+BN-a)
                pl.BlockSpec((Cp, Kp), lambda g: (0, 0)),                          # conv_b (+BN-b)
                pl.BlockSpec((Kp, chunk_w), lambda g: (0, 0)),                     # stacked mask
            ],
            out_specs=pl.BlockSpec((1, n_chunks, Cp, chunk_w), lambda g: (g, 0, 0, 0)),
        ),
        # Batch axis marked parallel; on v7x consider pltpu.CORE_PARALLEL / core_map if
        # a trace shows one TensorCore idle. No-op concern on single-TC v5e/v6e.
        compiler_params=pltpu.CompilerParams(
            dimension_semantics=("parallel",),
            vmem_limit_bytes=vmem_limit),
        cost_estimate=cost,
    )(x_fused, wa_k, wb_k, mask)

    # Undo the batch fusion / padding; (N, C, H*W) is already NCHW-flat.
    out = (out_fused.reshape(G, n_chunks, Cp, chunk_images, HW)
           .transpose(0, 1, 3, 2, 4)
           .reshape(Np, Cp, HW))
    return out[:N, :C].reshape(N, C, H, W)


# ----------------------------- pure-JAX reference -----------------------------
def _conv3x3_nhwc(x, w):
    return jax.lax.conv_general_dilated(
        x, w, window_strides=(1, 1), padding="SAME",
        dimension_numbers=("NHWC", "HWIO", "NHWC"))


def residual_block_reference(x_nchw, params, *, eps=1e-5, last_relu=False):
    wa, ga, bta, ma, va, wb, gb, btb, mb, vb = params
    x = jnp.transpose(x_nchw, (0, 2, 3, 1)).astype(jnp.float32)
    y = _conv3x3_nhwc(x, wa)
    y = (y - ma) / jnp.sqrt(va + eps) * ga + bta
    y = jnp.maximum(y, 0.0)
    y = _conv3x3_nhwc(y, wb)
    y = (y - mb) / jnp.sqrt(vb + eps) * gb + btb
    y = x + y
    if last_relu:
        y = jnp.maximum(y, 0.0)
    return jnp.transpose(y, (0, 3, 1, 2))


if __name__ == "__main__":
    N, C, H, W = 2, 4, 16, 16
    key = jax.random.PRNGKey(0)
    keys = jax.random.split(key, 11)

    x = jax.random.normal(keys[0], (N, C, H, W), jnp.float32)

    # Deterministic synthetic parameters (shapes match the nn.Module __init__).
    wa = jax.random.normal(keys[1], (3, 3, C, C), jnp.float32) * 0.2   # conv_a (HWIO)
    ga = 1.0 + 0.1 * jax.random.normal(keys[2], (C,), jnp.float32)     # bn_a weight
    bta = 0.1 * jax.random.normal(keys[3], (C,), jnp.float32)          # bn_a bias
    ma = 0.1 * jax.random.normal(keys[4], (C,), jnp.float32)           # bn_a running_mean
    va = jax.random.uniform(keys[5], (C,), jnp.float32, 0.5, 1.5)      # bn_a running_var
    wb = jax.random.normal(keys[6], (3, 3, C, C), jnp.float32) * 0.2   # conv_b (HWIO)
    gb = 1.0 + 0.1 * jax.random.normal(keys[7], (C,), jnp.float32)
    btb = 0.1 * jax.random.normal(keys[8], (C,), jnp.float32)
    mb = 0.1 * jax.random.normal(keys[9], (C,), jnp.float32)
    vb = jax.random.uniform(keys[10], (C,), jnp.float32, 0.5, 1.5)

    params = (wa, ga, bta, ma, va, wb, gb, btb, mb, vb)

    out = residual_block_forward(x, params, last_relu=False)
    out = jax.block_until_ready(out)

    ref = residual_block_reference(x, params, last_relu=False)
    assert out.shape == (N, C, H, W)
    err = jnp.max(jnp.abs(out - ref))
    assert jnp.allclose(out, ref, atol=2e-4, rtol=2e-4), f"max abs err {err}"

    print("KERNEL_OK")
</pallas_src>

<mosaic_0001>
module attributes {stable_mosaic.version = 11 : i64} {
  func.func @_residual_block_kernel(%arg0: i32, %arg1: memref<1x1x8x512xf32, #tpu.memory_space<vmem>>, %arg2: memref<8x80xf32, #tpu.memory_space<vmem>>, %arg3: memref<8x80xf32, #tpu.memory_space<vmem>>, %arg4: memref<80x512xf32, #tpu.memory_space<vmem>>, %arg5: memref<1x1x8x512xf32, #tpu.memory_space<vmem>>) attributes {dimension_semantics = [#tpu.dimension_semantics<parallel>], iteration_bounds = array<i64: 1>, scalar_prefetch = 0 : i64, scratch_operands = 0 : i64, tpu.core_type = #tpu.core_type<tc>, window_params = [{transform_indices = @transform_0, window_bounds = array<i64: 1, 1, 8, 512>}, {pipeline_mode = #tpu.pipeline_mode<synchronous>, transform_indices = @transform_1, window_bounds = array<i64: 8, 80>}, {pipeline_mode = #tpu.pipeline_mode<synchronous>, transform_indices = @transform_2, window_bounds = array<i64: 8, 80>}, {pipeline_mode = #tpu.pipeline_mode<synchronous>, transform_indices = @transform_3, window_bounds = array<i64: 80, 512>}, {transform_indices = @transform_4, window_bounds = array<i64: 1, 1, 8, 512>}]} {
    %cst = arith.constant 1.000000e+00 : f32
    %0 = vector.broadcast %cst : f32 to vector<8x512xf32>
    %c0_i32 = arith.constant 0 : i32
    %c0 = arith.constant 0 : index
    %1 = arith.index_cast %c0_i32 : i32 to index
    %c0_0 = arith.constant 0 : index
    %c0_1 = arith.constant 0 : index
    %2 = vector.load %arg1[%c0, %1, %c0_0, %c0_1] : memref<1x1x8x512xf32, #tpu.memory_space<vmem>>, vector<1x1x8x512xf32>
    %3 = vector.shape_cast %2 : vector<1x1x8x512xf32> to vector<8x512xf32>
    %c0_2 = arith.constant 0 : index
    %c0_3 = arith.constant 0 : index
    %4 = vector.load %arg2[%c0_2, %c0_3] : memref<8x80xf32, #tpu.memory_space<vmem>>, vector<8x80xf32>
    %c17_i32 = arith.constant 17 : i32
    %5 = tpu.dynamic_rotate %3 by %c17_i32 dim 1 : vector<8x512xf32>, i32 -> vector<8x512xf32>
    %c16_i32 = arith.constant 16 : i32
    %6 = tpu.dynamic_rotate %3 by %c16_i32 dim 1 : vector<8x512xf32>, i32 -> vector<8x512xf32>
    %c15_i32 = arith.constant 15 : i32
    %7 = tpu.dynamic_rotate %3 by %c15_i32 dim 1 : vector<8x512xf32>, i32 -> vector<8x512xf32>
    %c1_i32 = arith.constant 1 : i32
    %8 = tpu.dynamic_rotate %3 by %c1_i32 dim 1 : vector<8x512xf32>, i32 -> vector<8x512xf32>
    %c511_i32 = arith.constant 511 : i32
    %9 = tpu.dynamic_rotate %3 by %c511_i32 dim 1 : vector<8x512xf32>, i32 -> vector<8x512xf32>
    %c497_i32 = arith.constant 497 : i32
    %10 = tpu.dynamic_rotate %3 by %c497_i32 dim 1 : vector<8x512xf32>, i32 -> vector<8x512xf32>
    %c496_i32 = arith.constant 496 : i32
    %11 = tpu.dynamic_rotate %3 by %c496_i32 dim 1 : vector<8x512xf32>, i32 -> vector<8x512xf32>
    %c495_i32 = arith.constant 495 : i32
    %12 = tpu.dynamic_rotate %3 by %c495_i32 dim 1 : vector<8x512xf32>, i32 -> vector<8x512xf32>
    %13 = tpu.concatenate %5, %6, %7, %8, %3, %9, %10, %11, %12, %0 in 0 : vector<8x512xf32>, vector<8x512xf32>, vector<8x512xf32>, vector<8x512xf32>, vector<8x512xf32>, vector<8x512xf32>, vector<8x512xf32>, vector<8x512xf32>, vector<8x512xf32>, vector<8x512xf32> -> vector<80x512xf32>
    %c0_4 = arith.constant 0 : index
    %c0_5 = arith.constant 0 : index
    %14 = vector.load %arg4[%c0_4, %c0_5] : memref<80x512xf32, #tpu.memory_space<vmem>>, vector<80x512xf32>
    %15 = arith.mulf %13, %14 : vector<80x512xf32>
    %cst_6 = arith.constant dense<0.000000e+00> : vector<8x512xf32>
    %16 = tpu.matmul %4, %15, %cst_6 {dimension_numbers = #tpu.dot_dimension_numbers<[1], [0], [0], [1], [0, 0, 1, 1], [], []>} : vector<8x80xf32>, vector<80x512xf32>, vector<8x512xf32> -> vector<8x512xf32>
    %cst_7 = arith.constant 0.000000e+00 : f32
    %17 = vector.broadcast %cst_7 : f32 to vector<8x512xf32>
    %18 = arith.maximumf %16, %17 : vector<8x512xf32>
    %c0_8 = arith.constant 0 : index
    %c0_9 = arith.constant 0 : index
    %19 = vector.load %arg3[%c0_8, %c0_9] : memref<8x80xf32, #tpu.memory_space<vmem>>, vector<8x80xf32>
    %c17_i32_10 = arith.constant 17 : i32
    %20 = tpu.dynamic_rotate %18 by %c17_i32_10 dim 1 : vector<8x512xf32>, i32 -> vector<8x512xf32>
    %c16_i32_11 = arith.constant 16 : i32
    %21 = tpu.dynamic_rotate %18 by %c16_i32_11 dim 1 : vector<8x512xf32>, i32 -> vector<8x512xf32>
    %c15_i32_12 = arith.constant 15 : i32
    %22 = tpu.dynamic_rotate %18 by %c15_i32_12 dim 1 : vector<8x512xf32>, i32 -> vector<8x512xf32>
    %c1_i32_13 = arith.constant 1 : i32
    %23 = tpu.dynamic_rotate %18 by %c1_i32_13 dim 1 : vector<8x512xf32>, i32 -> vector<8x512xf32>
    %c511_i32_14 = arith.constant 511 : i32
    %24 = tpu.dynamic_rotate %18 by %c511_i32_14 dim 1 : vector<8x512xf32>, i32 -> vector<8x512xf32>
    %c497_i32_15 = arith.constant 497 : i32
    %25 = tpu.dynamic_rotate %18 by %c497_i32_15 dim 1 : vector<8x512xf32>, i32 -> vector<8x512xf32>
    %c496_i32_16 = arith.constant 496 : i32
    %26 = tpu.dynamic_rotate %18 by %c496_i32_16 dim 1 : vector<8x512xf32>, i32 -> vector<8x512xf32>
    %c495_i32_17 = arith.constant 495 : i32
    %27 = tpu.dynamic_rotate %18 by %c495_i32_17 dim 1 : vector<8x512xf32>, i32 -> vector<8x512xf32>
    %28 = tpu.concatenate %20, %21, %22, %23, %18, %24, %25, %26, %27, %0 in 0 : vector<8x512xf32>, vector<8x512xf32>, vector<8x512xf32>, vector<8x512xf32>, vector<8x512xf32>, vector<8x512xf32>, vector<8x512xf32>, vector<8x512xf32>, vector<8x512xf32>, vector<8x512xf32> -> vector<80x512xf32>
    %c0_18 = arith.constant 0 : index
    %c0_19 = arith.constant 0 : index
    %29 = vector.load %arg4[%c0_18, %c0_19] : memref<80x512xf32, #tpu.memory_space<vmem>>, vector<80x512xf32>
    %30 = arith.mulf %28, %29 : vector<80x512xf32>
    %cst_20 = arith.constant dense<0.000000e+00> : vector<8x512xf32>
    %31 = tpu.matmul %19, %30, %cst_20 {dimension_numbers = #tpu.dot_dimension_numbers<[1], [0], [0], [1], [0, 0, 1, 1], [], []>} : vector<8x80xf32>, vector<80x512xf32>, vector<8x512xf32> -> vector<8x512xf32>
    %32 = arith.addf %3, %31 : vector<8x512xf32>
    %c0_21 = arith.constant 0 : index
    %33 = arith.index_cast %c0_i32 : i32 to index
    %c0_22 = arith.constant 0 : index
    %c0_23 = arith.constant 0 : index
    %34 = vector.load %arg5[%c0_21, %33, %c0_22, %c0_23] : memref<1x1x8x512xf32, #tpu.memory_space<vmem>>, vector<1x1x8x512xf32>
    %35 = vector.shape_cast %34 : vector<1x1x8x512xf32> to vector<8x512xf32>
    %36 = vector.shape_cast %32 : vector<8x512xf32> to vector<1x1x8x512xf32>
    tpu.vector_store %arg5[%c0_21, %33, %c0_22, %c0_23], %36 {strides = array<i32>} : memref<1x1x8x512xf32, #tpu.memory_space<vmem>>, vector<1x1x8x512xf32>,
    %c1_i32_24 = arith.constant 1 : i32
    return
  }
  func.func @transform_0(%arg0: i32) -> (i32, i32, i32, i32) {
    %c0_i32 = arith.constant 0 : i32
    %c0_i32_0 = arith.constant 0 : i32
    %c0_i32_1 = arith.constant 0 : i32
    %c0_i32_2 = arith.constant 0 : i32
    return %arg0, %c0_i32, %c0_i32_0, %c0_i32_1 : i32, i32, i32, i32
  }
  func.func @transform_1(%arg0: i32) -> (i32, i32) {
    %c0_i32 = arith.constant 0 : i32
    %c0_i32_0 = arith.constant 0 : i32
    %c0_i32_1 = arith.constant 0 : i32
    return %c0_i32, %c0_i32_0 : i32, i32
  }
  func.func @transform_2(%arg0: i32) -> (i32, i32) {
    %c0_i32 = arith.constant 0 : i32
    %c0_i32_0 = arith.constant 0 : i32
    %c0_i32_1 = arith.constant 0 : i32
    return %c0_i32, %c0_i32_0 : i32, i32
  }
  func.func @transform_3(%arg0: i32) -> (i32, i32) {
    %c0_i32 = arith.constant 0 : i32
    %c0_i32_0 = arith.constant 0 : i32
    %c0_i32_1 = arith.constant 0 : i32
    return %c0_i32, %c0_i32_0 : i32, i32
  }
  func.func @transform_4(%arg0: i32) -> (i32, i32, i32, i32) {
    %c0_i32 = arith.constant 0 : i32
    %c0_i32_0 = arith.constant 0 : i32
    %c0_i32_1 = arith.constant 0 : i32
    %c0_i32_2 = arith.constant 0 : i32
    return %arg0, %c0_i32, %c0_i32_0, %c0_i32_1 : i32, i32, i32, i32
  }
}

</mosaic_0001>

<llo_original>
// kernel: tpu_custom_call.1
$region0: #{tpu_custom_call.1}
  #allocation0 [shape = 'u32[]', space=smem, size = 0x4, offset = 0x4, fixed_abs, tag = 'smem constant byte address 0x4 - core index']
  #allocation1 [shape = 'u32[144,128]{1,0:T(1,128)}', space=vmem, size = 0x12000, scoped, tag = 'internal scratch']
  %s0 = inlined_call_operand.hbm [shape: f32[1,1,8,512], index: 0, kind: input, shape index: {}]
  %s1 = inlined_call_operand.hbm [shape: f32[8,80], index: 1, kind: input, shape index: {}]
  %s2 = inlined_call_operand.hbm [shape: f32[8,80], index: 2, kind: input, shape index: {}]
  %s3 = inlined_call_operand.hbm [shape: f32[80,512], index: 3, kind: input, shape index: {}]
  %s4 = inlined_call_operand.hbm [shape: f32[1,1,8,512], index: 4, kind: output, shape index: {}]
  %s5 = sld [smem:[#allocation0]]
  $region42: #{tpu_custom_call.1} parent=0
    _
  %s7 = ssub.s32 1, %s5
  %s8 = scalar_select 0, %s7, %s5
  $region1: #{tpu_custom_call.1} parent=0
    #allocation2 [shape = 'u8[16384]{0}', space=vmem, size = 0x4000, scoped, tag = 'input window, operand 0, single buffered']
    #allocation3 [shape = 's32[1]{0}', space=sflag, size = 0x4, scoped, tag = 'scoped memory for tpu_custom_call.1']
    #allocation4 [shape = 's32[1]{0}', space=sflag, size = 0x4, scoped, tag = 'scoped memory for tpu_custom_call.1']
    #allocation5 [shape = 'u8[4096]{0}', space=vmem, size = 0x1000, scoped, tag = 'input window, operand 1, single buffered']
    #allocation6 [shape = 's32[1]{0}', space=sflag, size = 0x4, scoped, tag = 'scoped memory for tpu_custom_call.1']
    #allocation7 [shape = 'u8[4096]{0}', space=vmem, size = 0x1000, scoped, tag = 'input window, operand 2, single buffered']
    #allocation8 [shape = 'u8[163840]{0}', space=vmem, size = 0x28000, scoped, tag = 'input window, operand 3, single buffered']
    #allocation9 [shape = 's32[1]{0}', space=sflag, size = 0x4, scoped, tag = 'scoped memory for tpu_custom_call.1']
    #allocation10 [shape = 'u8[16384]{0}', space=vmem, size = 0x4000, scoped, tag = 'output window, operand 0, single buffered']
    %9 = vsyncpa [#allocation3], 0
    %10 = vsyncpa [#allocation6], 0
    %11 = vsyncpa [#allocation9], 0
    %12 = vsyncpa [#allocation4], 0
    // Predicated region
    $region2: #{tpu_custom_call.1} parent=1 // pred_check
      _
    $region3: #{tpu_custom_call.1} parent=1 // pred_check_branch
      %14 = sbr.rel (0) target = $region5
    $region4: #{tpu_custom_call.1} parent=1 // pred_region
      %s16 = ssub.s32 512, 512
      %17 = vsyncadd [#allocation3], %s16
      %s19 = sshll.u32 [#allocation2], 4
      %s20 = int_to_ptr.vmem [resolvable:$true] %s19
      %22 = dma.hbm_to_vmem [thread:$0]  %s0, 512, %s20, [#allocation3]
    $region5: #{tpu_custom_call.1} parent=1 // pred_fallthru
      _
    // Predicated region
    $region6: #{tpu_custom_call.1} parent=1 // pred_check
      _
    $region7: #{tpu_custom_call.1} parent=1 // pred_check_branch
      %24 = sbr.rel (0) target = $region9
    $region8: #{tpu_custom_call.1} parent=1 // pred_region
      %s26 = ssub.s32 128, 128
      %27 = vsyncadd [#allocation6], %s26
      %s29 = sshll.u32 [#allocation5], 4
      %s30 = int_to_ptr.vmem [resolvable:$true] %s29
      %32 = dma.hbm_to_vmem [thread:$0]  %s1, 128, %s30, [#allocation6]
    $region9: #{tpu_custom_call.1} parent=1 // pred_fallthru
      _
    // Predicated region
    $region10: #{tpu_custom_call.1} parent=1 // pred_check
      _
    $region11: #{tpu_custom_call.1} parent=1 // pred_check_branch
      %34 = sbr.rel (0) target = $region13
    $region12: #{tpu_custom_call.1} parent=1 // pred_region
      %s36 = ssub.s32 128, 128
      %37 = vsyncadd [#allocation6], %s36
      %s39 = sshll.u32 [#allocation7], 4
      %s40 = int_to_ptr.vmem [resolvable:$true] %s39
      %42 = dma.hbm_to_vmem [thread:$0]  %s2, 128, %s40, [#allocation6]
    $region13: #{tpu_custom_call.1} parent=1 // pred_fallthru
      _
    // Predicated region
    $region14: #{tpu_custom_call.1} parent=1 // pred_check
      _
    $region15: #{tpu_custom_call.1} parent=1 // pred_check_branch
      %44 = sbr.rel (0) target = $region17
    $region16: #{tpu_custom_call.1} parent=1 // pred_region
      %s46 = ssub.s32 5120, 5120
      %47 = vsyncadd [#allocation9], %s46
      %s48 = sshll.u32 [#allocation8], 4
      %s49 = int_to_ptr.vmem [resolvable:$true] %s48
      %54 = dma.hbm_to_vmem [thread:$0]  %s3, 5120, %s49, [#allocation9], 512, 512, 32
    $region17: #{tpu_custom_call.1} parent=1 // pred_fallthru
      _
    // Predicated region
    $region18: #{tpu_custom_call.1} parent=1 // pred_check
      _
    $region19: #{tpu_custom_call.1} parent=1 // pred_check_branch
      %56 = sbr.rel (0) target = $region21
    $region20: #{tpu_custom_call.1} parent=1 // pred_region
      %57 = dma.done [#allocation3], 512
    $region21: #{tpu_custom_call.1} parent=1 // pred_fallthru
      _
    // Predicated region
    $region22: #{tpu_custom_call.1} parent=1 // pred_check
      _
    $region23: #{tpu_custom_call.1} parent=1 // pred_check_branch
      %59 = sbr.rel (0) target = $region25
    $region24: #{tpu_custom_call.1} parent=1 // pred_region
      %60 = dma.done [#allocation6], 128
    $region25: #{tpu_custom_call.1} parent=1 // pred_fallthru
      _
    // Predicated region
    $region26: #{tpu_custom_call.1} parent=1 // pred_check
      _
    $region27: #{tpu_custom_call.1} parent=1 // pred_check_branch
      %62 = sbr.rel (0) target = $region29
    $region28: #{tpu_custom_call.1} parent=1 // pred_region
      %63 = dma.done [#allocation6], 128
    $region29: #{tpu_custom_call.1} parent=1 // pred_fallthru
      _
    // Predicated region
    $region30: #{tpu_custom_call.1} parent=1 // pred_check
      _
    $region31: #{tpu_custom_call.1} parent=1 // pred_check_branch
      %65 = sbr.rel (0) target = $region33
    $region32: #{tpu_custom_call.1} parent=1 // pred_region
      %66 = dma.done [#allocation9], 5120
    $region33: #{tpu_custom_call.1} parent=1 // pred_fallthru
      _
    %v67 = vld [vmem:[#allocation2] sm:$0xff]
    %v68 = vld [vmem:[#allocation2 + $0x8] sm:$0xff]
    %v69 = vld [vmem:[#allocation2 + $0x10] sm:$0xff]
    %v70 = vld [vmem:[#allocation2 + $0x18] sm:$0xff]
    %v71 = vld [vmem:[#allocation5] sm:$0xff]
    %72 = vrot.lane.b32.xlu0 %v67, 17
    %v73 = vpop.permute.xlu0 %72
    %74 = vrot.lane.b32.xlu0 %v68, 17
    %v75 = vpop.permute.xlu0 %74
    %76 = vrot.lane.b32.xlu0 %v69, 17
    %v77 = vpop.permute.xlu0 %76
    %78 = vrot.lane.b32.xlu0 %v70, 17
    %v79 = vpop.permute.xlu0 %78
    %v80 = vlaneseq
    %v81 = vand.u32 %v80, 127
    %vm82 = vcmp.lt.s32.totalorder %v81, 17
    %v83 = vsel %vm82, %v77, %v79
    %v84 = vsel %vm82, %v75, %v77
    %v85 = vsel %vm82, %v73, %v75
    %v86 = vsel %vm82, %v79, %v73
    %87 = vrot.lane.b32.xlu0 %v67, 16
    %v88 = vpop.permute.xlu0 %87
    %89 = vrot.lane.b32.xlu0 %v68, 16
    %v90 = vpop.permute.xlu0 %89
    %91 = vrot.lane.b32.xlu0 %v69, 16
    %v92 = vpop.permute.xlu0 %91
    %93 = vrot.lane.b32.xlu0 %v70, 16
    %v94 = vpop.permute.xlu0 %93
    %vm95 = vcmp.lt.s32.totalorder %v81, 16
    %v96 = vsel %vm95, %v92, %v94
    %v97 = vsel %vm95, %v90, %v92
    %v98 = vsel %vm95, %v88, %v90
    %v99 = vsel %vm95, %v94, %v88
    %100 = vrot.lane.b32.xlu0 %v67, 15
    %v101 = vpop.permute.xlu0 %100
    %102 = vrot.lane.b32.xlu0 %v68, 15
    %v103 = vpop.permute.xlu0 %102
    %104 = vrot.lane.b32.xlu0 %v69, 15
    %v105 = vpop.permute.xlu0 %104
    %106 = vrot.lane.b32.xlu0 %v70, 15
    %v107 = vpop.permute.xlu0 %106
    %vm108 = vcmp.lt.s32.totalorder %v81, 15
    %v109 = vsel %vm108, %v105, %v107
    %v110 = vsel %vm108, %v103, %v105
    %v111 = vsel %vm108, %v101, %v103
    %v112 = vsel %vm108, %v107, %v101
    %113 = vrot.lane.b32.xlu0 %v67, 1
    %v114 = vpop.permute.xlu0 %113
    %115 = vrot.lane.b32.xlu0 %v68, 1
    %v116 = vpop.permute.xlu0 %115
    %117 = vrot.lane.b32.xlu0 %v69, 1
    %v118 = vpop.permute.xlu0 %117
    %119 = vrot.lane.b32.xlu0 %v70, 1
    %v120 = vpop.permute.xlu0 %119
    %vm121 = vcmp.lt.s32.totalorder %v81, 1
    %v122 = vsel %vm121, %v118, %v120
    %v123 = vsel %vm121, %v116, %v118
    %v124 = vsel %vm121, %v114, %v116
    %v125 = vsel %vm121, %v120, %v114
    %126 = vrot.lane.b32.xlu0 %v67, 127
    %v127 = vpop.permute.xlu0 %126
    %128 = vrot.lane.b32.xlu0 %v68, 127
    %v129 = vpop.permute.xlu0 %128
    %130 = vrot.lane.b32.xlu0 %v69, 127
    %v131 = vpop.permute.xlu0 %130
    %132 = vrot.lane.b32.xlu0 %v70, 127
    %v133 = vpop.permute.xlu0 %132
    %vm134 = vcmp.lt.s32.totalorder %v81, 127
    %v135 = vsel %vm134, %v131, %v133
    %v136 = vsel %vm134, %v129, %v131
    %v137 = vsel %vm134, %v127, %v129
    %v138 = vsel %vm134, %v133, %v127
    %139 = vrot.lane.b32.xlu0 %v67, 113
    %v140 = vpop.permute.xlu0 %139
    %141 = vrot.lane.b32.xlu0 %v68, 113
    %v142 = vpop.permute.xlu0 %141
    %143 = vrot.lane.b32.xlu0 %v69, 113
    %v144 = vpop.permute.xlu0 %143
    %145 = vrot.lane.b32.xlu0 %v70, 113
    %v146 = vpop.permute.xlu0 %145
    %vm147 = vcmp.lt.s32.totalorder %v81, 113
    %v148 = vsel %vm147, %v144, %v146
    %v149 = vsel %vm147, %v142, %v144
    %v150 = vsel %vm147, %v140, %v142
    %v151 = vsel %vm147, %v146, %v140
    %152 = vrot.lane.b32.xlu0 %v67, 112
    %v153 = vpop.permute.xlu0 %152
    %154 = vrot.lane.b32.xlu0 %v68, 112
    %v155 = vpop.permute.xlu0 %154
    %156 = vrot.lane.b32.xlu0 %v69, 112
    %v157 = vpop.permute.xlu0 %156
    %158 = vrot.lane.b32.xlu0 %v70, 112
    %v159 = vpop.permute.xlu0 %158
    %vm160 = vcmp.lt.s32.totalorder %v81, 112
    %v161 = vsel %vm160, %v157, %v159
    %v162 = vsel %vm160, %v155, %v157
    %v163 = vsel %vm160, %v153, %v155
    %v164 = vsel %vm160, %v159, %v153
    %165 = vrot.lane.b32.xlu0 %v67, 111
    %v166 = vpop.permute.xlu0 %165
    %167 = vrot.lane.b32.xlu0 %v68, 111
    %v168 = vpop.permute.xlu0 %167
    %169 = vrot.lane.b32.xlu0 %v69, 111
    %v170 = vpop.permute.xlu0 %169
    %171 = vrot.lane.b32.xlu0 %v70, 111
    %v172 = vpop.permute.xlu0 %171
    %vm173 = vcmp.lt.s32.totalorder %v81, 111
    %v174 = vsel %vm173, %v170, %v172
    %v175 = vsel %vm173, %v168, %v170
    %v176 = vsel %vm173, %v166, %v168
    %v177 = vsel %vm173, %v172, %v166
    %v178 = vld [vmem:[#allocation8] sm:$0xff]
    %v179 = vld [vmem:[#allocation8 + $0x8] sm:$0xff]
    %v180 = vld [vmem:[#allocation8 + $0x10] sm:$0xff]
    %v181 = vld [vmem:[#allocation8 + $0x18] sm:$0xff]
    %v182 = vld [vmem:[#allocation8 + $0x20] sm:$0xff]
    %v183 = vld [vmem:[#allocation8 + $0x28] sm:$0xff]
    %v184 = vld [vmem:[#allocation8 + $0x30] sm:$0xff]
    %v185 = vld [vmem:[#allocation8 + $0x38] sm:$0xff]
    %v186 = vld [vmem:[#allocation8 + $0x40] sm:$0xff]
    %v187 = vld [vmem:[#allocation8 + $0x48] sm:$0xff]
    %v188 = vld [vmem:[#allocation8 + $0x50] sm:$0xff]
    %v189 = vld [vmem:[#allocation8 + $0x58] sm:$0xff]
    %v190 = vld [vmem:[#allocation8 + $0x60] sm:$0xff]
    %v191 = vld [vmem:[#allocation8 + $0x68] sm:$0xff]
    %v192 = vld [vmem:[#allocation8 + $0x70] sm:$0xff]
    %v193 = vld [vmem:[#allocation8 + $0x78] sm:$0xff]
    %v194 = vld [vmem:[#allocation8 + $0x80] sm:$0xff]
    %v195 = vld [vmem:[#allocation8 + $0x88] sm:$0xff]
    %v196 = vld [vmem:[#allocation8 + $0x90] sm:$0xff]
    %v197 = vld [vmem:[#allocation8 + $0x98] sm:$0xff]
    %v198 = vld [vmem:[#allocation8 + $0xa0] sm:$0xff]
    %v199 = vld [vmem:[#allocation8 + $0xa8] sm:$0xff]
    %v200 = vld [vmem:[#allocation8 + $0xb0] sm:$0xff]
    %v201 = vld [vmem:[#allocation8 + $0xb8] sm:$0xff]
    %v202 = vld [vmem:[#allocation8 + $0xc0] sm:$0xff]
    %v203 = vld [vmem:[#allocation8 + $0xc8] sm:$0xff]
    %v204 = vld [vmem:[#allocation8 + $0xd0] sm:$0xff]
    %v205 = vld [vmem:[#allocation8 + $0xd8] sm:$0xff]
    %v206 = vld [vmem:[#allocation8 + $0xe0] sm:$0xff]
    %v207 = vld [vmem:[#allocation8 + $0xe8] sm:$0xff]
    %v208 = vld [vmem:[#allocation8 + $0xf0] sm:$0xff]
    %v209 = vld [vmem:[#allocation8 + $0xf8] sm:$0xff]
    %v210 = vld [vmem:[#allocation8 + $0x100] sm:$0xff]
    %v211 = vld [vmem:[#allocation8 + $0x108] sm:$0xff]
    %v212 = vld [vmem:[#allocation8 + $0x110] sm:$0xff]
    %v213 = vld [vmem:[#allocation8 + $0x118] sm:$0xff]
    %v214 = vld [vmem:[#allocation8 + $0x120] sm:$0xff]
    %v215 = vld [vmem:[#allocation8 + $0x128] sm:$0xff]
    %v216 = vld [vmem:[#allocation8 + $0x130] sm:$0xff]
    %v217 = vld [vmem:[#allocation8 + $0x138] sm:$0xff]
    %v218 = vmul.f32 %v86, %v178
    %v219 = vmul.f32 %v85, %v179
    %v220 = vmul.f32 %v84, %v180
    %v221 = vmul.f32 %v83, %v181
    %v222 = vmul.f32 %v99, %v182
    %v223 = vmul.f32 %v98, %v183
    %v224 = vmul.f32 %v97, %v184
    %v225 = vmul.f32 %v96, %v185
    %v226 = vmul.f32 %v112, %v186
    %v227 = vmul.f32 %v111, %v187
    %v228 = vmul.f32 %v110, %v188
    %v229 = vmul.f32 %v109, %v189
    %v230 = vmul.f32 %v125, %v190
    %v231 = vmul.f32 %v124, %v191
    %v232 = vmul.f32 %v123, %v192
    %v233 = vmul.f32 %v122, %v193
    %v234 = vmul.f32 %v67, %v194
    %v235 = vmul.f32 %v68, %v195
    %v236 = vmul.f32 %v69, %v196
    %v237 = vmul.f32 %v70, %v197
    %v238 = vmul.f32 %v137, %v198
    %v239 = vmul.f32 %v136, %v199
    %v240 = vmul.f32 %v135, %v200
    %v241 = vmul.f32 %v138, %v201
    %v242 = vmul.f32 %v150, %v202
    %v243 = vmul.f32 %v149, %v203
    %v244 = vmul.f32 %v148, %v204
    %v245 = vmul.f32 %v151, %v205
    %v246 = vmul.f32 %v163, %v206
    %v247 = vmul.f32 %v162, %v207
    %v248 = vmul.f32 %v161, %v208
    %v249 = vmul.f32 %v164, %v209
    %v250 = vmul.f32 %v176, %v210
    %v251 = vmul.f32 %v175, %v211
    %v252 = vmul.f32 %v174, %v212
    %v253 = vmul.f32 %v177, %v213
    %vm254 = vcmask 654336
    %v256 = vsel %vm254, %v71, 0
    %258 = vmatprep.subr.mxu0 %v219
    %259 = vmatpush1.msra.mxu0 %v218
    %260 = vmatprep.subr.mxu0 %v223
    %261 = vmatpush1.msra.mxu0 %v222
    %262 = vmatprep.subr.mxu0 %v227
    %263 = vmatpush1.msra.mxu0 %v226
    %264 = vmatprep.subr.mxu0 %v231
    %265 = vmatpush1.msra.mxu0 %v230
    %266 = vmatprep.subr.mxu0 %v235
    %267 = vmatpush1.msra.mxu0 %v234
    %268 = vmatprep.subr.mxu0 %v239
    %269 = vmatpush1.msra.mxu0 %v238
    %270 = vmatprep.subr.mxu0 %v243
    %271 = vmatpush1.msra.mxu0 %v242
    %272 = vmatprep.subr.mxu0 %v247
    %273 = vmatpush1.msra.mxu0 %v246
    %274 = vmatprep.subr.mxu0 %v251
    %275 = vmatpush1.msra.mxu0 %v250
    %276 = vmatprep.subr.mxu0 %v215
    %277 = vmatpush1.msra.mxu0 %v214
    %278 = vmatprep.subr.mxu0 0.0
    %279 = vmatpush1.msra.mxu0 0.0
    %280 = vmatprep.subr.mxu0 0.0
    %281 = vmatpush1.msra.mxu0 0.0
    %282 = vmatprep.subr.mxu0 0.0
    %283 = vmatpush1.msra.mxu0 0.0
    %284 = vmatprep.subr.mxu0 0.0
    %285 = vmatpush1.msra.mxu0 0.0
    %286 = vmatprep.subr.mxu0 0.0
    %287 = vmatpush1.msra.mxu0 0.0
    %288 = vmatprep.subr.mxu0 0.0
    %289 = vmatpush1.msra.mxu0 0.0
    %290 = vmatprep.subr.mxu0 0.0
    %291 = vmatpush1.msra.mxu0 0.0
    %292 = vmatprep.subr.mxu0 0.0
    %293 = vmatpush1.msra.mxu0 0.0
    %294 = vmatprep.subr.mxu0 0.0
    %295 = vmatpush1.msra.mxu0 0.0
    %296 = vmatprep.subr.mxu0 0.0
    %297 = vmatpush1.msra.mxu0 0.0
    %298 = vmatprep.subr.mxu0 0.0
    %299 = vmatpush1.msra.mxu0 0.0
    %300 = vmatprep.subr.mxu0 0.0
    %301 = vmatpush1.msra.mxu0 0.0
    %302 = vmatprep.subr.mxu0 0.0
    %303 = vmatpush1.msra.mxu0 0.0
    %304 = vmatprep.subr.mxu0 0.0
    %305 = vmatpush1.msra.mxu0 0.0
    %306 = vmatprep.subr.mxu0 0.0
    %307 = vmatpush1.msra.mxu0 0.0
    %308 = vmatprep.subr.mxu0 0.0
    %309 = vmatpush1.msra.mxu0 0.0
    %310 = vmatprep.subr.mxu0 0.0
    %311 = vmatpush1.msra.mxu0 0.0
    %312 = vmatprep.subr.mxu0 0.0
    %313 = vmatpush1.msra.mxu0 0.0
    %314 = vmatprep.subr.mxu0 0.0
    %315 = vmatpush1.msra.mxu0 0.0
    %316 = vmatprep.subr.mxu0 0.0
    %317 = vmatpush1.msra.mxu0 0.0
    %318 = vmatprep.subr.mxu0 0.0
    %319 = vmatpush1.msra.mxu0 0.0
    %320 = vmatprep.subr.mxu0 0.0
    %321 = vmatpush1.msra.mxu0 0.0
    %322 = vmatprep.mubr.f32.mxu0 0.0
    %323 = vmatmul.mubr.f32.gmra.mrb[0].mxu0 %v256
    %v324 = vpop.f32.mrb[0].mxu0
    %v325 = vadd.f32 0.0, %v324
    %v326 = vpop.f32.mrb[0].mxu0
    %v327 = vadd.f32 0.0, %v326
    %328 = vdwg.mxu0
    %329 = vmatprep.subr.mxu0 %v221
    %330 = vmatpush1.msra.mxu0 %v220
    %331 = vmatprep.subr.mxu0 %v225
    %332 = vmatpush1.msra.mxu0 %v224
    %333 = vmatprep.subr.mxu0 %v229
    %334 = vmatpush1.msra.mxu0 %v228
    %335 = vmatprep.subr.mxu0 %v233
    %336 = vmatpush1.msra.mxu0 %v232
    %337 = vmatprep.subr.mxu0 %v237
    %338 = vmatpush1.msra.mxu0 %v236
    %339 = vmatprep.subr.mxu0 %v241
    %340 = vmatpush1.msra.mxu0 %v240
    %341 = vmatprep.subr.mxu0 %v245
    %342 = vmatpush1.msra.mxu0 %v244
    %343 = vmatprep.subr.mxu0 %v249
    %344 = vmatpush1.msra.mxu0 %v248
    %345 = vmatprep.subr.mxu0 %v253
    %346 = vmatpush1.msra.mxu0 %v252
    %347 = vmatprep.subr.mxu0 %v217
    %348 = vmatpush1.msra.mxu0 %v216
    %349 = vmatprep.subr.mxu0 0.0
    %350 = vmatpush1.msra.mxu0 0.0
    %351 = vmatprep.subr.mxu0 0.0
    %352 = vmatpush1.msra.mxu0 0.0
    %353 = vmatprep.subr.mxu0 0.0
    %354 = vmatpush1.msra.mxu0 0.0
    %355 = vmatprep.subr.mxu0 0.0
    %356 = vmatpush1.msra.mxu0 0.0
    %357 = vmatprep.subr.mxu0 0.0
    %358 = vmatpush1.msra.mxu0 0.0
    %359 = vmatprep.subr.mxu0 0.0
    %360 = vmatpush1.msra.mxu0 0.0
    %361 = vmatprep.subr.mxu0 0.0
    %362 = vmatpush1.msra.mxu0 0.0
    %363 = vmatprep.subr.mxu0 0.0
    %364 = vmatpush1.msra.mxu0 0.0
    %365 = vmatprep.subr.mxu0 0.0
    %366 = vmatpush1.msra.mxu0 0.0
    %367 = vmatprep.subr.mxu0 0.0
    %368 = vmatpush1.msra.mxu0 0.0
    %369 = vmatprep.subr.mxu0 0.0
    %370 = vmatpush1.msra.mxu0 0.0
    %371 = vmatprep.subr.mxu0 0.0
    %372 = vmatpush1.msra.mxu0 0.0
    %373 = vmatprep.subr.mxu0 0.0
    %374 = vmatpush1.msra.mxu0 0.0
    %375 = vmatprep.subr.mxu0 0.0
    %376 = vmatpush1.msra.mxu0 0.0
    %377 = vmatprep.subr.mxu0 0.0
    %378 = vmatpush1.msra.mxu0 0.0
    %379 = vmatprep.subr.mxu0 0.0
    %380 = vmatpush1.msra.mxu0 0.0
    %381 = vmatprep.subr.mxu0 0.0
    %382 = vmatpush1.msra.mxu0 0.0
    %383 = vmatprep.subr.mxu0 0.0
    %384 = vmatpush1.msra.mxu0 0.0
    %385 = vmatprep.subr.mxu0 0.0
    %386 = vmatpush1.msra.mxu0 0.0
    %387 = vmatprep.subr.mxu0 0.0
    %388 = vmatpush1.msra.mxu0 0.0
    %389 = vmatprep.subr.mxu0 0.0
    %390 = vmatpush1.msra.mxu0 0.0
    %391 = vmatprep.subr.mxu0 0.0
    %392 = vmatpush1.msra.mxu0 0.0
    %393 = vmatprep.mubr.f32.mxu0 0.0
    %394 = vmatmul.mubr.f32.gmra.mrb[0].mxu0 %v256
    %v395 = vpop.f32.mrb[0].mxu0
    %v396 = vadd.f32 0.0, %v395
    %v397 = vpop.f32.mrb[0].mxu0
    %v398 = vadd.f32 0.0, %v397
    %399 = vdwg.mxu0
    %v400 = vmax.f32 %v325, 0.0
    %v401 = vmax.f32 %v327, 0.0
    %v402 = vmax.f32 %v396, 0.0
    %v403 = vmax.f32 %v398, 0.0
    %v404 = vld [vmem:[#allocation7] sm:$0xff]
    %405 = vrot.lane.b32.xlu0 %v400, 17
    %v406 = vpop.permute.xlu0 %405
    %407 = vrot.lane.b32.xlu0 %v401, 17
    %v408 = vpop.permute.xlu0 %407
    %409 = vrot.lane.b32.xlu0 %v402, 17
    %v410 = vpop.permute.xlu0 %409
    %411 = vrot.lane.b32.xlu0 %v403, 17
    %v412 = vpop.permute.xlu0 %411
    %v413 = vsel %vm82, %v410, %v412
    %v414 = vsel %vm82, %v408, %v410
    %v415 = vsel %vm82, %v406, %v408
    %v416 = vsel %vm82, %v412, %v406
    %417 = vrot.lane.b32.xlu0 %v400, 16
    %v418 = vpop.permute.xlu0 %417
    %419 = vrot.lane.b32.xlu0 %v401, 16
    %v420 = vpop.permute.xlu0 %419
    %421 = vrot.lane.b32.xlu0 %v402, 16
    %v422 = vpop.permute.xlu0 %421
    %423 = vrot.lane.b32.xlu0 %v403, 16
    %v424 = vpop.permute.xlu0 %423
    %v425 = vsel %vm95, %v422, %v424
    %v426 = vsel %vm95, %v420, %v422
    %v427 = vsel %vm95, %v418, %v420
    %v428 = vsel %vm95, %v424, %v418
    %429 = vrot.lane.b32.xlu0 %v400, 15
    %v430 = vpop.permute.xlu0 %429
    %431 = vrot.lane.b32.xlu0 %v401, 15
    %v432 = vpop.permute.xlu0 %431
    %433 = vrot.lane.b32.xlu0 %v402, 15
    %v434 = vpop.permute.xlu0 %433
    %435 = vrot.lane.b32.xlu0 %v403, 15
    %v436 = vpop.permute.xlu0 %435
    %v437 = vsel %vm108, %v434, %v436
    %v438 = vsel %vm108, %v432, %v434
    %v439 = vsel %vm108, %v430, %v432
    %v440 = vsel %vm108, %v436, %v430
    %441 = vrot.lane.b32.xlu0 %v400, 1
    %v442 = vpop.permute.xlu0 %441
    %443 = vrot.lane.b32.xlu0 %v401, 1
    %v444 = vpop.permute.xlu0 %443
    %445 = vrot.lane.b32.xlu0 %v402, 1
    %v446 = vpop.permute.xlu0 %445
    %447 = vrot.lane.b32.xlu0 %v403, 1
    %v448 = vpop.permute.xlu0 %447
    %v449 = vsel %vm121, %v446, %v448
    %v450 = vsel %vm121, %v444, %v446
    %v451 = vsel %vm121, %v442, %v444
    %v452 = vsel %vm121, %v448, %v442
    %453 = vrot.lane.b32.xlu0 %v400, 127
    %v454 = vpop.permute.xlu0 %453
    %455 = vrot.lane.b32.xlu0 %v401, 127
    %v456 = vpop.permute.xlu0 %455
    %457 = vrot.lane.b32.xlu0 %v402, 127
    %v458 = vpop.permute.xlu0 %457
    %459 = vrot.lane.b32.xlu0 %v403, 127
    %v460 = vpop.permute.xlu0 %459
    %v461 = vsel %vm134, %v458, %v460
    %v462 = vsel %vm134, %v456, %v458
    %v463 = vsel %vm134, %v454, %v456
    %v464 = vsel %vm134, %v460, %v454
    %465 = vrot.lane.b32.xlu0 %v400, 113
    %v466 = vpop.permute.xlu0 %465
    %467 = vrot.lane.b32.xlu0 %v401, 113
    %v468 = vpop.permute.xlu0 %467
    %469 = vrot.lane.b32.xlu0 %v402, 113
    %v470 = vpop.permute.xlu0 %469
    %471 = vrot.lane.b32.xlu0 %v403, 113
    %v472 = vpop.permute.xlu0 %471
    %v473 = vsel %vm147, %v470, %v472
    %v474 = vsel %vm147, %v468, %v470
    %v475 = vsel %vm147, %v466, %v468
    %v476 = vsel %vm147, %v472, %v466
    %477 = vrot.lane.b32.xlu0 %v400, 112
    %v478 = vpop.permute.xlu0 %477
    %479 = vrot.lane.b32.xlu0 %v401, 112
    %v480 = vpop.permute.xlu0 %479
    %481 = vrot.lane.b32.xlu0 %v402, 112
    %v482 = vpop.permute.xlu0 %481
    %483 = vrot.lane.b32.xlu0 %v403, 112
    %v484 = vpop.permute.xlu0 %483
    %v485 = vsel %vm160, %v482, %v484
    %v486 = vsel %vm160, %v480, %v482
    %v487 = vsel %vm160, %v478, %v480
    %v488 = vsel %vm160, %v484, %v478
    %489 = vrot.lane.b32.xlu0 %v400, 111
    %v490 = vpop.permute.xlu0 %489
    %491 = vrot.lane.b32.xlu0 %v401, 111
    %v492 = vpop.permute.xlu0 %491
    %493 = vrot.lane.b32.xlu0 %v402, 111
    %v494 = vpop.permute.xlu0 %493
    %495 = vrot.lane.b32.xlu0 %v403, 111
    %v496 = vpop.permute.xlu0 %495
    %v497 = vsel %vm173, %v494, %v496
    %v498 = vsel %vm173, %v492, %v494
    %v499 = vsel %vm173, %v490, %v492
    %v500 = vsel %vm173, %v496, %v490
    %v501 = vmul.f32 %v416, %v178
    %v502 = vmul.f32 %v415, %v179
    %v503 = vmul.f32 %v414, %v180
    %v504 = vmul.f32 %v413, %v181
    %v505 = vmul.f32 %v428, %v182
    %v506 = vmul.f32 %v427, %v183
    %v507 = vmul.f32 %v426, %v184
    %v508 = vmul.f32 %v425, %v185
    %v509 = vmul.f32 %v440, %v186
    %v510 = vmul.f32 %v439, %v187
    %v511 = vmul.f32 %v438, %v188
    %v512 = vmul.f32 %v437, %v189
    %v513 = vmul.f32 %v452, %v190
    %v514 = vmul.f32 %v451, %v191
    %v515 = vmul.f32 %v450, %v192
    %v516 = vmul.f32 %v449, %v193
    %v517 = vmul.f32 %v400, %v194
    %v518 = vmul.f32 %v401, %v195
    %v519 = vmul.f32 %v402, %v196
    %v520 = vmul.f32 %v403, %v197
    %v521 = vmul.f32 %v463, %v198
    %v522 = vmul.f32 %v462, %v199
    %v523 = vmul.f32 %v461, %v200
    %v524 = vmul.f32 %v464, %v201
    %v525 = vmul.f32 %v475, %v202
    %v526 = vmul.f32 %v474, %v203
    %v527 = vmul.f32 %v473, %v204
    %v528 = vmul.f32 %v476, %v205
    %v529 = vmul.f32 %v487, %v206
    %v530 = vmul.f32 %v486, %v207
    %v531 = vmul.f32 %v485, %v208
    %v532 = vmul.f32 %v488, %v209
    %v533 = vmul.f32 %v499, %v210
    %v534 = vmul.f32 %v498, %v211
    %v535 = vmul.f32 %v497, %v212
    %v536 = vmul.f32 %v500, %v213
    %v538 = vsel %vm254, %v404, 0
    %540 = vmatprep.subr.mxu0 %v502
    %541 = vmatpush1.msra.mxu0 %v501
    %542 = vmatprep.subr.mxu0 %v506
    %543 = vmatpush1.msra.mxu0 %v505
    %544 = vmatprep.subr.mxu0 %v510
    %545 = vmatpush1.msra.mxu0 %v509
    %546 = vmatprep.subr.mxu0 %v514
    %547 = vmatpush1.msra.mxu0 %v513
    %548 = vmatprep.subr.mxu0 %v518
    %549 = vmatpush1.msra.mxu0 %v517
    %550 = vmatprep.subr.mxu0 %v522
    %551 = vmatpush1.msra.mxu0 %v521
    %552 = vmatprep.subr.mxu0 %v526
    %553 = vmatpush1.msra.mxu0 %v525
    %554 = vmatprep.subr.mxu0 %v530
    %555 = vmatpush1.msra.mxu0 %v529
    %556 = vmatprep.subr.mxu0 %v534
    %557 = vmatpush1.msra.mxu0 %v533
    %558 = vmatprep.subr.mxu0 %v215
    %559 = vmatpush1.msra.mxu0 %v214
    %560 = vmatprep.subr.mxu0 0.0
    %561 = vmatpush1.msra.mxu0 0.0
    %562 = vmatprep.subr.mxu0 0.0
    %563 = vmatpush1.msra.mxu0 0.0
    %564 = vmatprep.subr.mxu0 0.0
    %565 = vmatpush1.msra.mxu0 0.0
    %566 = vmatprep.subr.mxu0 0.0
    %567 = vmatpush1.msra.mxu0 0.0
    %568 = vmatprep.subr.mxu0 0.0
    %569 = vmatpush1.msra.mxu0 0.0
    %570 = vmatprep.subr.mxu0 0.0
    %571 = vmatpush1.msra.mxu0 0.0
    %572 = vmatprep.subr.mxu0 0.0
    %573 = vmatpush1.msra.mxu0 0.0
    %574 = vmatprep.subr.mxu0 0.0
    %575 = vmatpush1.msra.mxu0 0.0
    %576 = vmatprep.subr.mxu0 0.0
    %577 = vmatpush1.msra.mxu0 0.0
    %578 = vmatprep.subr.mxu0 0.0
    %579 = vmatpush1.msra.mxu0 0.0
    %580 = vmatprep.subr.mxu0 0.0
    %581 = vmatpush1.msra.mxu0 0.0
    %582 = vmatprep.subr.mxu0 0.0
    %583 = vmatpush1.msra.mxu0 0.0
    %584 = vmatprep.subr.mxu0 0.0
    %585 = vmatpush1.msra.mxu0 0.0
    %586 = vmatprep.subr.mxu0 0.0
    %587 = vmatpush1.msra.mxu0 0.0
    %588 = vmatprep.subr.mxu0 0.0
    %589 = vmatpush1.msra.mxu0 0.0
    %590 = vmatprep.subr.mxu0 0.0
    %591 = vmatpush1.msra.mxu0 0.0
    %592 = vmatprep.subr.mxu0 0.0
    %593 = vmatpush1.msra.mxu0 0.0
    %594 = vmatprep.subr.mxu0 0.0
    %595 = vmatpush1.msra.mxu0 0.0
    %596 = vmatprep.subr.mxu0 0.0
    %597 = vmatpush1.msra.mxu0 0.0
    %598 = vmatprep.subr.mxu0 0.0
    %599 = vmatpush1.msra.mxu0 0.0
    %600 = vmatprep.subr.mxu0 0.0
    %601 = vmatpush1.msra.mxu0 0.0
    %602 = vmatprep.subr.mxu0 0.0
    %603 = vmatpush1.msra.mxu0 0.0
    %604 = vmatprep.mubr.f32.mxu0 0.0
    %605 = vmatmul.mubr.f32.gmra.mrb[0].mxu0 %v538
    %v606 = vpop.f32.mrb[0].mxu0
    %v607 = vadd.f32 0.0, %v606
    %v608 = vpop.f32.mrb[0].mxu0
    %v609 = vadd.f32 0.0, %v608
    %610 = vdwg.mxu0
    %611 = vmatprep.subr.mxu0 %v504
    %612 = vmatpush1.msra.mxu0 %v503
    %613 = vmatprep.subr.mxu0 %v508
    %614 = vmatpush1.msra.mxu0 %v507
    %615 = vmatprep.subr.mxu0 %v512
    %616 = vmatpush1.msra.mxu0 %v511
    %617 = vmatprep.subr.mxu0 %v516
    %618 = vmatpush1.msra.mxu0 %v515
    %619 = vmatprep.subr.mxu0 %v520
    %620 = vmatpush1.msra.mxu0 %v519
    %621 = vmatprep.subr.mxu0 %v524
    %622 = vmatpush1.msra.mxu0 %v523
    %623 = vmatprep.subr.mxu0 %v528
    %624 = vmatpush1.msra.mxu0 %v527
    %625 = vmatprep.subr.mxu0 %v532
    %626 = vmatpush1.msra.mxu0 %v531
    %627 = vmatprep.subr.mxu0 %v536
    %628 = vmatpush1.msra.mxu0 %v535
    %629 = vmatprep.subr.mxu0 %v217
    %630 = vmatpush1.msra.mxu0 %v216
    %631 = vmatprep.subr.mxu0 0.0
    %632 = vmatpush1.msra.mxu0 0.0
    %633 = vmatprep.subr.mxu0 0.0
    %634 = vmatpush1.msra.mxu0 0.0
    %635 = vmatprep.subr.mxu0 0.0
    %636 = vmatpush1.msra.mxu0 0.0
    %637 = vmatprep.subr.mxu0 0.0
    %638 = vmatpush1.msra.mxu0 0.0
    %639 = vmatprep.subr.mxu0 0.0
    %640 = vmatpush1.msra.mxu0 0.0
    %641 = vmatprep.subr.mxu0 0.0
    %642 = vmatpush1.msra.mxu0 0.0
    %643 = vmatprep.subr.mxu0 0.0
    %644 = vmatpush1.msra.mxu0 0.0
    %645 = vmatprep.subr.mxu0 0.0
    %646 = vmatpush1.msra.mxu0 0.0
    %647 = vmatprep.subr.mxu0 0.0
    %648 = vmatpush1.msra.mxu0 0.0
    %649 = vmatprep.subr.mxu0 0.0
    %650 = vmatpush1.msra.mxu0 0.0
    %651 = vmatprep.subr.mxu0 0.0
    %652 = vmatpush1.msra.mxu0 0.0
    %653 = vmatprep.subr.mxu0 0.0
    %654 = vmatpush1.msra.mxu0 0.0
    %655 = vmatprep.subr.mxu0 0.0
    %656 = vmatpush1.msra.mxu0 0.0
    %657 = vmatprep.subr.mxu0 0.0
    %658 = vmatpush1.msra.mxu0 0.0
    %659 = vmatprep.subr.mxu0 0.0
    %660 = vmatpush1.msra.mxu0 0.0
    %661 = vmatprep.subr.mxu0 0.0
    %662 = vmatpush1.msra.mxu0 0.0
    %663 = vmatprep.subr.mxu0 0.0
    %664 = vmatpush1.msra.mxu0 0.0
    %665 = vmatprep.subr.mxu0 0.0
    %666 = vmatpush1.msra.mxu0 0.0
    %667 = vmatprep.subr.mxu0 0.0
    %668 = vmatpush1.msra.mxu0 0.0
    %669 = vmatprep.subr.mxu0 0.0
    %670 = vmatpush1.msra.mxu0 0.0
    %671 = vmatprep.subr.mxu0 0.0
    %672 = vmatpush1.msra.mxu0 0.0
    %673 = vmatprep.subr.mxu0 0.0
    %674 = vmatpush1.msra.mxu0 0.0
    %675 = vmatprep.mubr.f32.mxu0 0.0
    %676 = vmatmul.mubr.f32.gmra.mrb[0].mxu0 %v538
    %v677 = vpop.f32.mrb[0].mxu0
    %v678 = vadd.f32 0.0, %v677
    %v679 = vpop.f32.mrb[0].mxu0
    %v680 = vadd.f32 0.0, %v679
    %681 = vdwg.mxu0
    %v682 = vadd.f32 %v67, %v607
    %v683 = vadd.f32 %v68, %v609
    %v684 = vadd.f32 %v69, %v678
    %v685 = vadd.f32 %v70, %v680
    %686 = vst [vmem:[#allocation10] sm:$0xff] %v682
    %687 = vst [vmem:[#allocation10 + $0x8] sm:$0xff] %v683
    %688 = vst [vmem:[#allocation10 + $0x10] sm:$0xff] %v684
    %689 = vst [vmem:[#allocation10 + $0x18] sm:$0xff] %v685
    // Predicated region
    $region34: #{tpu_custom_call.1} parent=1 // pred_check
      _
    $region35: #{tpu_custom_call.1} parent=1 // pred_check_branch
      %691 = sbr.rel (0) target = $region37
    $region36: #{tpu_custom_call.1} parent=1 // pred_region
      %s693 = ssub.s32 512, 512
      %694 = vsyncadd [#allocation4], %s693
      %s696 = sshll.u32 [#allocation10], 4
      %s697 = int_to_ptr.vmem [resolvable:$true] %s696
      %699 = dma.vmem_to_hbm [thread:$0]  %s697, 512, %s4, [#allocation4]
    $region37: #{tpu_custom_call.1} parent=1 // pred_fallthru
      _
    // Predicated region
    $region38: #{tpu_custom_call.1} parent=1 // pred_check
      _
    $region39: #{tpu_custom_call.1} parent=1 // pred_check_branch
      %701 = sbr.rel (0) target = $region41
    $region40: #{tpu_custom_call.1} parent=1 // pred_region
      %702 = dma.done [#allocation4], 512
    $region41: #{tpu_custom_call.1} parent=1 // pred_fallthru
      _
    %703 = vsyncpa [#allocation3], 1
    %704 = vsyncpa [#allocation6], 1
    %705 = vsyncpa [#allocation9], 1
    %706 = vsyncpa [#allocation4], 1

</llo_original>
